<compile_context>
chip_gen: v5e
topology: v5e:2x2
jax: 0.10.0
libtpu: 0.0.40
codegen_flags: <defaults>
</compile_context>

<pallas_src>
import functools

import jax
import jax.numpy as jnp
from jax.experimental import pallas as pl
from jax.experimental.pallas import tpu as pltpu


_LRELU_SLOPE = 0.01      # nn.LeakyReLU() default negative_slope
_BN_EPS = 1e-5           # nn.BatchNorm2d default eps

_VMEM_CACHE = None


def _vmem_limit_bytes():
    """~3/4 of physical VMEM: 48 MiB on v7x (64 physical), 96 MiB on v5e/v6e (128)."""
    global _VMEM_CACHE
    if _VMEM_CACHE is None:
        cap = 64 * 1024 * 1024
        try:
            cap = int(pltpu.get_tpu_info().vmem_capacity_bytes)
        except Exception:
            pass  # conservative fallback (valid on every generation)
        _VMEM_CACHE = (cap * 3) // 4
    return _VMEM_CACHE


def _round_up(x, m):
    return (x + m - 1) // m * m


def _row_tiling(m, k, cout):
    """Row-tile size: multiple of 128 (unmasked stores / full v5e MXU rows),
    up to 1024 on big-VMEM chips, shrunk if the working set would not fit."""
    budget = _vmem_limit_bytes()
    max_tm = 1024 if budget >= 96 * 1024 * 1024 else 512
    tm = max_tm if m >= max_tm else _round_up(m, 128)

    def usage(t):
        # double-buffered bf16 input + resident bf16 weight
        # + double-buffered bf16 output + f32 stats blocks
        return 2 * t * k * 2 + k * cout * 2 + 2 * t * cout * 2 + 4 * cout * 4

    while tm > 128 and usage(tm) > budget // 2:
        tm = max(128, _round_up(tm // 2, 128))
    return tm, _round_up(m, tm)


# ----------------------------- Pallas kernels -------------------------------

def _conv_stats_kernel(*refs, fuse, tm, m_valid, need_mask, slope):
    """One conv layer as an im2col matmul.

    Optional fused prologue: the PREVIOUS layer's BatchNorm affine + LeakyReLU
    applied per patch column.  Then y = x @ w on the MXU (f32 accumulation),
    stored bf16, plus per-tile partial column sum / sum-of-squares for THIS
    layer's BatchNorm statistics (pad rows masked out of the stats).
    """
    if fuse:
        x_ref, scale_ref, shift_ref, w_ref, y_ref, sum_ref, ssq_ref = refs
        x = x_ref[...].astype(jnp.float32) * scale_ref[...] + shift_ref[...]
        x = jnp.where(x >= 0, x, slope * x).astype(jnp.bfloat16)
    else:
        x_ref, w_ref, y_ref, sum_ref, ssq_ref = refs
        x = x_ref[...]

    y = jnp.dot(x, w_ref[...], preferred_element_type=jnp.float32)
    y_ref[...] = y.astype(y_ref.dtype)

    ys = y
    if need_mask:
        rows = pl.program_id(0) * tm + jax.lax.broadcasted_iota(jnp.int32, (tm, 1), 0)
        ys = jnp.where(rows < m_valid, y, 0.0)
    sum_ref[0] = jnp.sum(ys, axis=0, keepdims=True)
    ssq_ref[0] = jnp.sum(ys * ys, axis=0, keepdims=True)


def _head_kernel(y_ref, scale_ref, shift_ref, w_ref, b_ref, o_ref, *, slope):
    """Fused: last layer's BN affine + LeakyReLU + 1x1 conv (C->1) + sigmoid."""
    x = y_ref[...].astype(jnp.float32) * scale_ref[...] + shift_ref[...]
    x = jnp.where(x >= 0, x, slope * x)
    # C->1 matvec as a VPU multiply + lane (XLU) reduction; an MXU matmul with a
    # single output column would waste 127/128 of the array.
    logits = jnp.sum(x * w_ref[...], axis=1, keepdims=True) + b_ref[...]
    o_ref[...] = jax.nn.sigmoid(logits)


# --------------------------- pallas_call wrappers ----------------------------

def _conv_stats_call(patches, w_t, scale_k, shift_k, tm, m_valid):
    m_pad, k = patches.shape
    cout = w_t.shape[1]
    grid_m = m_pad // tm
    fuse = scale_k is not None
    kernel = functools.partial(
        _conv_stats_kernel, fuse=fuse, tm=tm, m_valid=m_valid,
        need_mask=(m_pad != m_valid), slope=_LRELU_SLOPE)

    in_specs = [pl.BlockSpec((tm, k), lambda i: (i, 0))]
    args = [patches]
    if fuse:
        in_specs += [pl.BlockSpec((1, k), lambda i: (0, 0)),
                     pl.BlockSpec((1, k), lambda i: (0, 0))]
        args += [scale_k, shift_k]
    in_specs.append(pl.BlockSpec((k, cout), lambda i: (0, 0)))   # weight stays resident
    args.append(w_t)

    return pl.pallas_call(
        kernel,
        grid=(grid_m,),
        out_shape=(
            jax.ShapeDtypeStruct((m_pad, cout), jnp.bfloat16),      # y (feeds next matmul)
            jax.ShapeDtypeStruct((grid_m, 1, cout), jnp.float32),   # per-tile partial sum
            jax.ShapeDtypeStruct((grid_m, 1, cout), jnp.float32),   # per-tile partial sum sq
        ),
        in_specs=in_specs,
        out_specs=(
            pl.BlockSpec((tm, cout), lambda i: (i, 0)),
            pl.BlockSpec((1, 1, cout), lambda i: (i, 0, 0)),
            pl.BlockSpec((1, 1, cout), lambda i: (i, 0, 0)),
        ),
        compiler_params=pltpu.CompilerParams(
            dimension_semantics=("parallel",),     # no revisited blocks -> megacore-shardable
            vmem_limit_bytes=_vmem_limit_bytes(),
        ),
    )(*args)


def _head_call(y, scale, shift, w_row, bias, tm):
    m_pad, c = y.shape
    grid_m = m_pad // tm
    kernel = functools.partial(_head_kernel, slope=_LRELU_SLOPE)
    return pl.pallas_call(
        kernel,
        grid=(grid_m,),
        out_shape=jax.ShapeDtypeStruct((m_pad, 1), jnp.float32),
        in_specs=[
            pl.BlockSpec((tm, c), lambda i: (i, 0)),
            pl.BlockSpec((1, c), lambda i: (0, 0)),
            pl.BlockSpec((1, c), lambda i: (0, 0)),
            pl.BlockSpec((1, c), lambda i: (0, 0)),
            pl.BlockSpec((1, 1), lambda i: (0, 0)),
        ],
        out_specs=pl.BlockSpec((tm, 1), lambda i: (i, 0)),
        compiler_params=pltpu.CompilerParams(
            dimension_semantics=("parallel",),
            vmem_limit_bytes=_vmem_limit_bytes(),
        ),
    )(y, scale, shift, w_row, bias)


# -------------------------------- JAX glue -----------------------------------

def _init_conv(key, cout, cin, k):
    kw, kb = jax.random.split(key)
    fan_in = cin * k * k
    bound = 1.0 / (fan_in ** 0.5)
    w = jax.random.uniform(kw, (cout, cin, k, k), jnp.float32, -bound, bound)
    b = jax.random.uniform(kb, (cout,), jnp.float32, -bound, bound)
    return w, b


def _extract_patches_nhwc(x, pf):
    # x: (B, H, W, C) -> (B*Ho*Wo, pf*pf*C); column order = (kh, kw, c), c minor.
    b, h, w, c = x.shape
    ho, wo = h // pf, w // pf
    x = x.reshape(b, ho, pf, wo, pf, c)
    x = x.transpose(0, 1, 3, 2, 4, 5)      # channels stay minor (no lane permute)
    return x.reshape(b * ho * wo, pf * pf * c), (b, ho, wo)


class Discriminator:
    """JAX/Pallas port of the PyTorch Discriminator (forward pass only).

    Per hidden layer: one fused kernel = [prev BN affine + LeakyReLU] -> matmul
    -> bf16 store + per-tile BN partial stats.  BN scale/shift (training-mode,
    biased variance) are tiny per-channel vectors computed in glue.  The head
    kernel fuses the last BN + LeakyReLU + (C->1) matvec + sigmoid.  Hidden
    conv biases are cancelled exactly by BatchNorm mean subtraction and are
    therefore never applied; the head bias is applied.
    """

    def __init__(self, patch_size: int, ch_mult: int = 128, key=None):
        if key is None:
            key = jax.random.PRNGKey(0)
        self.patch_size = patch_size
        self.n = ch_mult
        self.patch_factors = self._get_patch_factors()
        channels = self._get_channels()
        keys = jax.random.split(key, len(self.patch_factors) + 1)

        self.layers = []      # kernel-side params (bf16, (kh,kw,cin) column order, no K pad)
        self.ref_layers = []  # original PyTorch-layout params for the reference check
        for i, pf in enumerate(self.patch_factors):
            cin, cout = channels[i]
            w, b = _init_conv(keys[i], cout, cin, pf)
            # (cout, cin, kh, kw) -> (K=kh*kw*cin, cout) matching NHWC patch columns.
            w_t = w.transpose(0, 2, 3, 1).reshape(cout, pf * pf * cin).T
            w_t = jnp.asarray(w_t, jnp.bfloat16)
            gamma = jnp.ones((1, cout), jnp.float32)    # BatchNorm2d defaults
            beta = jnp.zeros((1, cout), jnp.float32)
            self.layers.append((pf, w_t, gamma, beta))
            self.ref_layers.append((pf, w, b, gamma, beta))

        cin = channels[-1][-1]
        w, b = _init_conv(keys[-1], 1, cin, 1)
        self.head_w = jnp.asarray(w.reshape(1, cin), jnp.float32)   # VPU path -> keep f32
        self.head_b = jnp.asarray(b.reshape(1, 1), jnp.float32)
        self.head_w_ref = w
        self.head_b_ref = b

    def _get_patch_factors(self):
        pfs = list(reversed(
            [f for f in range(1, self.patch_size + 1) if self.patch_size % f == 0][1:-1]))
        if len(pfs) == 1:
            pfs *= 2
        return pfs

    def _get_channels(self):
        channels = [(self.n * 2 ** i, self.n * 2 ** (i + 1))
                    for i, _ in enumerate(self.patch_factors)]
        channels[0] = (3, self.n * 2)
        return channels

    def __call__(self, x):
        # x: (B, 3, H, W) float32 NCHW (PyTorch interface).  Cast to bf16 FIRST so
        # the NHWC transpose / im2col move 2-byte data; channels-last afterwards.
        x = jnp.transpose(x, (0, 2, 3, 1)).astype(jnp.bfloat16)

        scale = shift = None   # previous layer's folded BN scale/shift (fused prologue)
        for pf, w_t, gamma, beta in self.layers:
            patches, (b, ho, wo) = _extract_patches_nhwc(x, pf)
            m, k = patches.shape
            cout = w_t.shape[1]
            tm, m_pad = _row_tiling(m, k, cout)
            if m_pad != m:
                patches = jnp.pad(patches, ((0, m_pad - m), (0, 0)))
            if scale is not None:
                # per-channel (1, cin) -> per-column (1, pf*pf*cin): channel is the
                # minor axis of the (kh, kw, cin) patch column order.
                scale_k = jnp.tile(scale, (1, pf * pf))
                shift_k = jnp.tile(shift, (1, pf * pf))
            else:
                scale_k = shift_k = None

            y, psum, pssq = _conv_stats_call(patches, w_t, scale_k, shift_k, tm, m)

            # BatchNorm2d training-mode (biased) stats over the m valid rows.
            col_sum = jnp.sum(psum, axis=0)                        # (1, cout)
            col_ssq = jnp.sum(pssq, axis=0)
            mean = col_sum / m
            var = jnp.maximum(col_ssq / m - mean * mean, 0.0)      # clamp vs cancellation
            inv = jax.lax.rsqrt(var + _BN_EPS)
            scale = gamma * inv
            shift = beta - mean * scale

            # Raw conv output (bf16); its BN + LeakyReLU are applied inside the NEXT
            # kernel (or the head), saving an HBM round trip of (M, Cout) per layer.
            x = y[:m].reshape(b, ho, wo, cout)

        # Head: fused last BN + LeakyReLU + 1x1 conv (C->1) + bias + sigmoid.
        b, ho, wo, c = x.shape
        ym = x.reshape(b * ho * wo, c)
        m = ym.shape[0]
        tm, m_pad = _row_tiling(m, c, 1)
        if m_pad != m:
            ym = jnp.pad(ym, ((0, m_pad - m), (0, 0)))
        probs = _head_call(ym, scale, shift, self.head_w, self.head_b, tm)
        probs = probs[:m].reshape(b, ho * wo)
        # Tiny per-sample spatial mean stays in glue; matches `.mean((-2,-1)).squeeze()`.
        return jnp.squeeze(jnp.mean(probs, axis=1))


# --------------------------- pure-JAX reference check ------------------------

def _reference_forward(model, x):
    for pf, w, b, gamma, beta in model.ref_layers:
        y = jax.lax.conv_general_dilated(
            x.astype(jnp.bfloat16), w.astype(jnp.bfloat16), (pf, pf), "VALID",
            dimension_numbers=("NCHW", "OIHW", "NCHW"),
            preferred_element_type=jnp.float32)
        y = y + b.reshape(1, -1, 1, 1)
        mean = jnp.mean(y, axis=(0, 2, 3), keepdims=True)
        var = jnp.mean((y - mean) ** 2, axis=(0, 2, 3), keepdims=True)
        y = (y - mean) * jax.lax.rsqrt(var + _BN_EPS)
        y = y * gamma.reshape(1, -1, 1, 1) + beta.reshape(1, -1, 1, 1)
        x = jnp.where(y >= 0, y, _LRELU_SLOPE * y)
    y = jnp.einsum("bchw,oc->bohw", x, model.head_w_ref.reshape(1, -1))
    y = y + model.head_b_ref.reshape(1, 1, 1, 1)
    p = jax.nn.sigmoid(y)
    return jnp.squeeze(jnp.mean(p, axis=(-2, -1)))


if __name__ == "__main__":
    key = jax.random.PRNGKey(0)
    k_param, k_x = jax.random.split(key)

    # Small shapes: patch_size=8 -> patch_factors [4, 2]; ch_mult=4 ->
    # channels [(3, 8), (8, 16)]; input 16x16 -> 4x4 -> 2x2 -> mean -> (B,)
    model = Discriminator(patch_size=8, ch_mult=4, key=k_param)
    x = jax.random.normal(k_x, (2, 3, 16, 16), jnp.float32)

    out = jax.block_until_ready(model(x))
    assert out.shape == (2,), out.shape

    ref = _reference_forward(model, x)
    assert jnp.allclose(out, ref, rtol=1e-2, atol=1e-2), (out, ref)

    print("KERNEL_OK")
</pallas_src>

<mosaic_0001>
module attributes {stable_mosaic.version = 11 : i64} {
  func.func @_conv_stats_kernel(%arg0: i32, %arg1: memref<128x48xbf16, #tpu.memory_space<vmem>>, %arg2: memref<48x8xbf16, #tpu.memory_space<vmem>>, %arg3: memref<128x8xbf16, #tpu.memory_space<vmem>>, %arg4: memref<1x1x8xf32, #tpu.memory_space<vmem>>, %arg5: memref<1x1x8xf32, #tpu.memory_space<vmem>>) attributes {dimension_semantics = [#tpu.dimension_semantics<parallel>], iteration_bounds = array<i64: 1>, scalar_prefetch = 0 : i64, scratch_operands = 0 : i64, tpu.core_type = #tpu.core_type<tc>, window_params = [{transform_indices = @transform_0, window_bounds = array<i64: 128, 48>}, {pipeline_mode = #tpu.pipeline_mode<synchronous>, transform_indices = @transform_1, window_bounds = array<i64: 48, 8>}, {transform_indices = @transform_2, window_bounds = array<i64: 128, 8>}, {transform_indices = @transform_3, window_bounds = array<i64: 1, 1, 8>}, {transform_indices = @transform_4, window_bounds = array<i64: 1, 1, 8>}]} {
    %c0 = arith.constant 0 : index
    %c0_0 = arith.constant 0 : index
    %0 = vector.load %arg1[%c0, %c0_0] : memref<128x48xbf16, #tpu.memory_space<vmem>>, vector<128x48xbf16>
    %c0_1 = arith.constant 0 : index
    %c0_2 = arith.constant 0 : index
    %1 = vector.load %arg2[%c0_1, %c0_2] : memref<48x8xbf16, #tpu.memory_space<vmem>>, vector<48x8xbf16>
    %cst = arith.constant dense<0.000000e+00> : vector<128x8xf32>
    %2 = tpu.matmul %0, %1, %cst {dimension_numbers = #tpu.dot_dimension_numbers<[1], [0], [0], [1], [0, 0, 1, 1], [], []>} : vector<128x48xbf16>, vector<48x8xbf16>, vector<128x8xf32> -> vector<128x8xf32>
    %3 = arith.truncf %2 : vector<128x8xf32> to vector<128x8xbf16>
    %c0_3 = arith.constant 0 : index
    %c0_4 = arith.constant 0 : index
    %4 = vector.load %arg3[%c0_3, %c0_4] : memref<128x8xbf16, #tpu.memory_space<vmem>>, vector<128x8xbf16>
    tpu.vector_store %arg3[%c0_3, %c0_4], %3 {strides = array<i32>} : memref<128x8xbf16, #tpu.memory_space<vmem>>, vector<128x8xbf16>,
    %c128_i32 = arith.constant 128 : i32
    %5 = arith.muli %arg0, %c128_i32 : i32
    %6 = tpu.iota {dimensions = array<i32: 0>} : vector<128x1xi32>
    %7 = vector.broadcast %5 : i32 to vector<128x1xi32>
    %8 = arith.addi %7, %6 : vector<128x1xi32>
    %c32_i32 = arith.constant 32 : i32
    %9 = vector.broadcast %c32_i32 : i32 to vector<128x1xi32>
    %10 = arith.cmpi slt, %8, %9 : vector<128x1xi32>
    %cst_5 = arith.constant 0.000000e+00 : f32
    %11 = vector.shape_cast %10 : vector<128x1xi1> to vector<128x1xi1>
    %12 = vector.broadcast %11 : vector<128x1xi1> to vector<128x8xi1>
    %13 = vector.broadcast %cst_5 : f32 to vector<128x8xf32>
    %14 = arith.select %12, %2, %13 : vector<128x8xi1>, vector<128x8xf32>
    %cst_6 = arith.constant dense<0.000000e+00> : vector<8xf32>
    %15 = vector.multi_reduction <add>, %14, %cst_6 [0] : vector<128x8xf32> to vector<8xf32>
    %16 = vector.shape_cast %15 : vector<8xf32> to vector<1x8xf32>
    %c0_7 = arith.constant 0 : index
    %c0_8 = arith.constant 0 : index
    %c0_9 = arith.constant 0 : index
    %17 = vector.load %arg4[%c0_7, %c0_8, %c0_9] : memref<1x1x8xf32, #tpu.memory_space<vmem>>, vector<1x1x8xf32>
    %18 = vector.shape_cast %17 : vector<1x1x8xf32> to vector<1x8xf32>
    %19 = vector.shape_cast %16 : vector<1x8xf32> to vector<1x1x8xf32>
    tpu.vector_store %arg4[%c0_7, %c0_8, %c0_9], %19 {strides = array<i32>} : memref<1x1x8xf32, #tpu.memory_space<vmem>>, vector<1x1x8xf32>,
    %20 = arith.mulf %14, %14 : vector<128x8xf32>
    %cst_10 = arith.constant dense<0.000000e+00> : vector<8xf32>
    %21 = vector.multi_reduction <add>, %20, %cst_10 [0] : vector<128x8xf32> to vector<8xf32>
    %22 = vector.shape_cast %21 : vector<8xf32> to vector<1x8xf32>
    %c0_11 = arith.constant 0 : index
    %c0_12 = arith.constant 0 : index
    %c0_13 = arith.constant 0 : index
    %23 = vector.load %arg5[%c0_11, %c0_12, %c0_13] : memref<1x1x8xf32, #tpu.memory_space<vmem>>, vector<1x1x8xf32>
    %24 = vector.shape_cast %23 : vector<1x1x8xf32> to vector<1x8xf32>
    %25 = vector.shape_cast %22 : vector<1x8xf32> to vector<1x1x8xf32>
    tpu.vector_store %arg5[%c0_11, %c0_12, %c0_13], %25 {strides = array<i32>} : memref<1x1x8xf32, #tpu.memory_space<vmem>>, vector<1x1x8xf32>,
    return
  }
  func.func @transform_0(%arg0: i32) -> (i32, i32) {
    %c0_i32 = arith.constant 0 : i32
    %c0_i32_0 = arith.constant 0 : i32
    return %arg0, %c0_i32 : i32, i32
  }
  func.func @transform_1(%arg0: i32) -> (i32, i32) {
    %c0_i32 = arith.constant 0 : i32
    %c0_i32_0 = arith.constant 0 : i32
    %c0_i32_1 = arith.constant 0 : i32
    return %c0_i32, %c0_i32_0 : i32, i32
  }
  func.func @transform_2(%arg0: i32) -> (i32, i32) {
    %c0_i32 = arith.constant 0 : i32
    %c0_i32_0 = arith.constant 0 : i32
    return %arg0, %c0_i32 : i32, i32
  }
  func.func @transform_3(%arg0: i32) -> (i32, i32, i32) {
    %c0_i32 = arith.constant 0 : i32
    %c0_i32_0 = arith.constant 0 : i32
    %c0_i32_1 = arith.constant 0 : i32
    return %arg0, %c0_i32, %c0_i32_0 : i32, i32, i32
  }
  func.func @transform_4(%arg0: i32) -> (i32, i32, i32) {
    %c0_i32 = arith.constant 0 : i32
    %c0_i32_0 = arith.constant 0 : i32
    %c0_i32_1 = arith.constant 0 : i32
    return %arg0, %c0_i32, %c0_i32_0 : i32, i32, i32
  }
}

</mosaic_0001>

<llo_original>
// kernel: tpu_custom_call.1
$region0: #{tpu_custom_call.1}
  #allocation0 [shape = 'u32[]', space=smem, size = 0x4, offset = 0x4, fixed_abs, tag = 'smem constant byte address 0x4 - core index']
  #allocation1 [shape = 'u32[72,128]{1,0:T(1,128)}', space=vmem, size = 0x9000, scoped, tag = 'internal scratch']
  %s0 = inlined_call_operand.vmem [shape: bf16[128,48], index: 0, kind: input, shape index: {}]
  %s1 = inlined_call_operand.vmem [shape: bf16[48,8], index: 1, kind: input, shape index: {}]
  %s2 = inlined_call_operand.vmem [shape: bf16[128,8], index: 2, kind: output, shape index: {0}]
  %s3 = inlined_call_operand.hbm [shape: f32[1,1,8], index: 3, kind: output, shape index: {1}]
  %s4 = inlined_call_operand.hbm [shape: f32[1,1,8], index: 4, kind: output, shape index: {2}]
  %5 = xla_tuple %s2, %s3, %s4
  %s6 = sld [smem:[#allocation0]]
  $region34: #{tpu_custom_call.1} parent=0
    _
  %s8 = ssub.s32 1, %s6
  %s9 = scalar_select 0, %s8, %s6
  $region1: #{tpu_custom_call.1} parent=0
    #allocation2 [shape = 'u8[512]{0}', space=vmem, size = 0x400, scoped, tag = 'output window, operand 1, single buffered']
    #allocation3 [shape = 's32[1]{0}', space=sflag, size = 0x4, scoped, tag = 'scoped memory for tpu_custom_call.1']
    #allocation4 [shape = 'u8[512]{0}', space=vmem, size = 0x400, scoped, tag = 'output window, operand 2, single buffered']
    #allocation5 [shape = 's32[1]{0}', space=sflag, size = 0x4, scoped, tag = 'scoped memory for tpu_custom_call.1']
    %10 = vsyncpa [#allocation3], 0
    %11 = vsyncpa [#allocation5], 0
    // Predicated region
    $region2: #{tpu_custom_call.1} parent=1 // pred_check
      _
    $region3: #{tpu_custom_call.1} parent=1 // pred_check_branch
      %13 = sbr.rel (0) target = $region5
    $region4: #{tpu_custom_call.1} parent=1 // pred_region
      _
    $region5: #{tpu_custom_call.1} parent=1 // pred_fallthru
      _
    // Predicated region
    $region6: #{tpu_custom_call.1} parent=1 // pred_check
      _
    $region7: #{tpu_custom_call.1} parent=1 // pred_check_branch
      %15 = sbr.rel (0) target = $region9
    $region8: #{tpu_custom_call.1} parent=1 // pred_region
      _
    $region9: #{tpu_custom_call.1} parent=1 // pred_fallthru
      _
    %v17 = vld [vmem:[%s0] sm:$0xf]
    %v18 = vld [vmem:[%s0 + $0x4] sm:$0xf]
    %v19 = vld [vmem:[%s0 + $0x8] sm:$0xf]
    %v20 = vld [vmem:[%s0 + $0xc] sm:$0xf]
    %v21 = vld [vmem:[%s0 + $0x10] sm:$0xf]
    %v22 = vld [vmem:[%s0 + $0x14] sm:$0xf]
    %v23 = vld [vmem:[%s0 + $0x18] sm:$0xf]
    %v24 = vld [vmem:[%s0 + $0x1c] sm:$0xf]
    %v25 = vld [vmem:[%s0 + $0x20] sm:$0xf]
    %v26 = vld [vmem:[%s0 + $0x24] sm:$0xf]
    %v27 = vld [vmem:[%s0 + $0x28] sm:$0xf]
    %v28 = vld [vmem:[%s0 + $0x2c] sm:$0xf]
    %v29 = vld [vmem:[%s0 + $0x30] sm:$0xf]
    %v30 = vld [vmem:[%s0 + $0x34] sm:$0xf]
    %v31 = vld [vmem:[%s0 + $0x38] sm:$0xf]
    %v32 = vld [vmem:[%s0 + $0x3c] sm:$0xf]
    %v33 = vld [vmem:[%s1] sm:$0xf]
    %v34 = vld [vmem:[%s1 + $0x4] sm:$0xf]
    %v35 = vld [vmem:[%s1 + $0x8] sm:$0xf]
    %v36 = vld [vmem:[%s1 + $0xc] sm:$0xf]
    %v37 = vld [vmem:[%s1 + $0x10] sm:$0xf]
    %v38 = vld [vmem:[%s1 + $0x14] sm:$0xf]
    %v55 = vunpack.c.l.b16 %v17
    %v56 = vunpack.c.l.b16 %v18
    %v57 = vunpack.c.l.b16 %v19
    %v58 = vunpack.c.l.b16 %v20
    %v59 = vunpack.c.l.b16 %v21
    %v60 = vunpack.c.l.b16 %v22
    %v61 = vunpack.c.l.b16 %v23
    %v62 = vunpack.c.l.b16 %v24
    %v63 = vunpack.c.l.b16 %v25
    %v64 = vunpack.c.l.b16 %v26
    %v65 = vunpack.c.l.b16 %v27
    %v66 = vunpack.c.l.b16 %v28
    %v67 = vunpack.c.l.b16 %v29
    %v68 = vunpack.c.l.b16 %v30
    %v69 = vunpack.c.l.b16 %v31
    %v70 = vunpack.c.l.b16 %v32
    %v71 = vpack.c.b16 %v56, %v55
    %v72 = vpack.c.b16 %v58, %v57
    %v73 = vpack.c.b16 %v60, %v59
    %v74 = vpack.c.b16 %v62, %v61
    %v75 = vpack.c.b16 %v64, %v63
    %v76 = vpack.c.b16 %v66, %v65
    %v77 = vpack.c.b16 %v68, %v67
    %v78 = vpack.c.b16 %v70, %v69
    %v85 = vunpack.c.l.b16 %v33
    %v86 = vunpack.c.l.b16 %v34
    %v87 = vunpack.c.l.b16 %v35
    %v88 = vunpack.c.l.b16 %v36
    %v89 = vunpack.c.l.b16 %v37
    %v90 = vunpack.c.l.b16 %v38
    %v91 = vpack.c.b16 %v86, %v85
    %v92 = vpack.c.b16 %v88, %v87
    %v93 = vpack.c.b16 %v90, %v89
    %vm97 = vcmask 392192
    %v99 = vsel %vm97, %v71, 0
    %v102 = vsel %vm97, %v72, 0
    %v105 = vsel %vm97, %v73, 0
    %v108 = vsel %vm97, %v74, 0
    %v111 = vsel %vm97, %v75, 0
    %v114 = vsel %vm97, %v76, 0
    %v117 = vsel %vm97, %v77, 0
    %v120 = vsel %vm97, %v78, 0
    %122 = vmatpush.bf16.msra.mxu0 0
    %123 = vmatpush.bf16.msra.mxu0 0
    %124 = vmatpush.bf16.msra.mxu0 0
    %125 = vmatpush.bf16.msra.mxu0 0
    %126 = vmatpush.bf16.msra.mxu0 0
    %127 = vmatpush.bf16.msra.mxu0 %v93
    %128 = vmatpush.bf16.msra.mxu0 %v92
    %129 = vmatpush.bf16.msra.mxu0 %v91
    %130 = vmatmul.bf16.gmra.mxu0 %v99
    %v131 = vpop.f32.mrf.mxu0
    %v132 = vadd.f32 0.0, %v131
    %v133 = vpop.f32.mrf.mxu0
    %v134 = vadd.f32 0.0, %v133
    %135 = vmatmul.bf16.gmra.mxu0 %v102
    %v136 = vpop.f32.mrf.mxu0
    %v137 = vadd.f32 0.0, %v136
    %v138 = vpop.f32.mrf.mxu0
    %v139 = vadd.f32 0.0, %v138
    %140 = vmatmul.bf16.gmra.mxu0 %v105
    %v141 = vpop.f32.mrf.mxu0
    %v142 = vadd.f32 0.0, %v141
    %v143 = vpop.f32.mrf.mxu0
    %v144 = vadd.f32 0.0, %v143
    %145 = vmatmul.bf16.gmra.mxu0 %v108
    %v146 = vpop.f32.mrf.mxu0
    %v147 = vadd.f32 0.0, %v146
    %v148 = vpop.f32.mrf.mxu0
    %v149 = vadd.f32 0.0, %v148
    %150 = vmatmul.bf16.gmra.mxu0 %v111
    %v151 = vpop.f32.mrf.mxu0
    %v152 = vadd.f32 0.0, %v151
    %v153 = vpop.f32.mrf.mxu0
    %v154 = vadd.f32 0.0, %v153
    %155 = vmatmul.bf16.gmra.mxu0 %v114
    %v156 = vpop.f32.mrf.mxu0
    %v157 = vadd.f32 0.0, %v156
    %v158 = vpop.f32.mrf.mxu0
    %v159 = vadd.f32 0.0, %v158
    %160 = vmatmul.bf16.gmra.mxu0 %v117
    %v161 = vpop.f32.mrf.mxu0
    %v162 = vadd.f32 0.0, %v161
    %v163 = vpop.f32.mrf.mxu0
    %v164 = vadd.f32 0.0, %v163
    %165 = vmatmul.bf16.gmra.mxu0 %v120
    %v166 = vpop.f32.mrf.mxu0
    %v167 = vadd.f32 0.0, %v166
    %v168 = vpop.f32.mrf.mxu0
    %v169 = vadd.f32 0.0, %v168
    %170 = vdwg.mxu0
    %v171 = vpack.c.bf16 %v132, %v132
    %v172 = vpack.c.bf16 %v134, %v134
    %v173 = vpack.c.bf16 %v137, %v137
    %v174 = vpack.c.bf16 %v139, %v139
    %v175 = vpack.c.bf16 %v142, %v142
    %v176 = vpack.c.bf16 %v144, %v144
    %v177 = vpack.c.bf16 %v147, %v147
    %v178 = vpack.c.bf16 %v149, %v149
    %v179 = vpack.c.bf16 %v152, %v152
    %v180 = vpack.c.bf16 %v154, %v154
    %v181 = vpack.c.bf16 %v157, %v157
    %v182 = vpack.c.bf16 %v159, %v159
    %v183 = vpack.c.bf16 %v162, %v162
    %v184 = vpack.c.bf16 %v164, %v164
    %v185 = vpack.c.bf16 %v167, %v167
    %v186 = vpack.c.bf16 %v169, %v169
    %vm187 = vcmask 60416
    %188 = vst.msk [vmem:[%s2] sm:$0xf] %vm187, %v171
    %189 = vst.msk [vmem:[%s2 + $0x4] sm:$0xf] %vm187, %v172
    %190 = vst.msk [vmem:[%s2 + $0x8] sm:$0xf] %vm187, %v173
    %191 = vst.msk [vmem:[%s2 + $0xc] sm:$0xf] %vm187, %v174
    %192 = vst.msk [vmem:[%s2 + $0x10] sm:$0xf] %vm187, %v175
    %193 = vst.msk [vmem:[%s2 + $0x14] sm:$0xf] %vm187, %v176
    %194 = vst.msk [vmem:[%s2 + $0x18] sm:$0xf] %vm187, %v177
    %195 = vst.msk [vmem:[%s2 + $0x1c] sm:$0xf] %vm187, %v178
    %196 = vst.msk [vmem:[%s2 + $0x20] sm:$0xf] %vm187, %v179
    %197 = vst.msk [vmem:[%s2 + $0x24] sm:$0xf] %vm187, %v180
    %198 = vst.msk [vmem:[%s2 + $0x28] sm:$0xf] %vm187, %v181
    %199 = vst.msk [vmem:[%s2 + $0x2c] sm:$0xf] %vm187, %v182
    %200 = vst.msk [vmem:[%s2 + $0x30] sm:$0xf] %vm187, %v183
    %201 = vst.msk [vmem:[%s2 + $0x34] sm:$0xf] %vm187, %v184
    %202 = vst.msk [vmem:[%s2 + $0x38] sm:$0xf] %vm187, %v185
    %203 = vst.msk [vmem:[%s2 + $0x3c] sm:$0xf] %vm187, %v186
    %s204 = smul.u32 0, 128
    %v205 = vlaneseq
    %v206 = vshrl.u32 %v205, 7
    %v207 = vadd.s32 %v206, 8
    %v208 = vadd.s32 %v206, 16
    %v209 = vadd.s32 %v206, 24
    %v210 = vadd.s32 %v206, 32
    %v211 = vadd.s32 %v206, 40
    %v212 = vadd.s32 %v206, 48
    %v213 = vadd.s32 %v206, 56
    %v214 = vadd.s32 %v206, 64
    %v215 = vadd.s32 %v206, 72
    %v216 = vadd.s32 %v206, 80
    %v217 = vadd.s32 %v206, 88
    %v218 = vadd.s32 %v206, 96
    %v219 = vadd.s32 %v206, 104
    %v220 = vadd.s32 %v206, 112
    %v221 = vadd.s32 %v206, 120
    %v222 = vstv %s204
    %v223 = vadd.s32 %v222, %v206
    %v224 = vadd.s32 %v222, %v207
    %v225 = vadd.s32 %v222, %v208
    %v226 = vadd.s32 %v222, %v209
    %v227 = vadd.s32 %v222, %v210
    %v228 = vadd.s32 %v222, %v211
    %v229 = vadd.s32 %v222, %v212
    %v230 = vadd.s32 %v222, %v213
    %v231 = vadd.s32 %v222, %v214
    %v232 = vadd.s32 %v222, %v215
    %v233 = vadd.s32 %v222, %v216
    %v234 = vadd.s32 %v222, %v217
    %v235 = vadd.s32 %v222, %v218
    %v236 = vadd.s32 %v222, %v219
    %v237 = vadd.s32 %v222, %v220
    %v238 = vadd.s32 %v222, %v221
    %vm239 = vcmp.lt.s32.totalorder %v223, 32
    %vm240 = vcmp.lt.s32.totalorder %v224, 32
    %vm241 = vcmp.lt.s32.totalorder %v225, 32
    %vm242 = vcmp.lt.s32.totalorder %v226, 32
    %vm243 = vcmp.lt.s32.totalorder %v227, 32
    %vm244 = vcmp.lt.s32.totalorder %v228, 32
    %vm245 = vcmp.lt.s32.totalorder %v229, 32
    %vm246 = vcmp.lt.s32.totalorder %v230, 32
    %vm247 = vcmp.lt.s32.totalorder %v231, 32
    %vm248 = vcmp.lt.s32.totalorder %v232, 32
    %vm249 = vcmp.lt.s32.totalorder %v233, 32
    %vm250 = vcmp.lt.s32.totalorder %v234, 32
    %vm251 = vcmp.lt.s32.totalorder %v235, 32
    %vm252 = vcmp.lt.s32.totalorder %v236, 32
    %vm253 = vcmp.lt.s32.totalorder %v237, 32
    %vm254 = vcmp.lt.s32.totalorder %v238, 32
    %v255 = vsel %vm239, 1, 0
    %v256 = vsel %vm240, 1, 0
    %v257 = vsel %vm241, 1, 0
    %v258 = vsel %vm242, 1, 0
    %v259 = vsel %vm243, 1, 0
    %v260 = vsel %vm244, 1, 0
    %v261 = vsel %vm245, 1, 0
    %v262 = vsel %vm246, 1, 0
    %v263 = vsel %vm247, 1, 0
    %v264 = vsel %vm248, 1, 0
    %v265 = vsel %vm249, 1, 0
    %v266 = vsel %vm250, 1, 0
    %v267 = vsel %vm251, 1, 0
    %v268 = vsel %vm252, 1, 0
    %v269 = vsel %vm253, 1, 0
    %v270 = vsel %vm254, 1, 0
    %vm271 = vcmp.eq.s32.totalorder %v255, 1
    %vm272 = vcmp.eq.s32.totalorder %v256, 1
    %vm273 = vcmp.eq.s32.totalorder %v257, 1
    %vm274 = vcmp.eq.s32.totalorder %v258, 1
    %vm275 = vcmp.eq.s32.totalorder %v259, 1
    %vm276 = vcmp.eq.s32.totalorder %v260, 1
    %vm277 = vcmp.eq.s32.totalorder %v261, 1
    %vm278 = vcmp.eq.s32.totalorder %v262, 1
    %vm279 = vcmp.eq.s32.totalorder %v263, 1
    %vm280 = vcmp.eq.s32.totalorder %v264, 1
    %vm281 = vcmp.eq.s32.totalorder %v265, 1
    %vm282 = vcmp.eq.s32.totalorder %v266, 1
    %vm283 = vcmp.eq.s32.totalorder %v267, 1
    %vm284 = vcmp.eq.s32.totalorder %v268, 1
    %vm285 = vcmp.eq.s32.totalorder %v269, 1
    %vm286 = vcmp.eq.s32.totalorder %v270, 1
    %v287 = vsel %vm271, %v132, 0.0
    %v288 = vsel %vm272, %v134, 0.0
    %v289 = vsel %vm273, %v137, 0.0
    %v290 = vsel %vm274, %v139, 0.0
    %v291 = vsel %vm275, %v142, 0.0
    %v292 = vsel %vm276, %v144, 0.0
    %v293 = vsel %vm277, %v147, 0.0
    %v294 = vsel %vm278, %v149, 0.0
    %v295 = vsel %vm279, %v152, 0.0
    %v296 = vsel %vm280, %v154, 0.0
    %v297 = vsel %vm281, %v157, 0.0
    %v298 = vsel %vm282, %v159, 0.0
    %v299 = vsel %vm283, %v162, 0.0
    %v300 = vsel %vm284, %v164, 0.0
    %v301 = vsel %vm285, %v167, 0.0
    %v302 = vsel %vm286, %v169, 0.0
    %vm303 = vcmask 64512
    %v304 = vsel %vm303, %v287, 0.0
    %v305 = vsel %vm303, %v288, 0.0
    %v306 = vadd.f32 %v304, %v305
    %v307 = vsel %vm303, %v289, 0.0
    %v308 = vadd.f32 %v306, %v307
    %v309 = vsel %vm303, %v290, 0.0
    %v310 = vadd.f32 %v308, %v309
    %v311 = vsel %vm303, %v291, 0.0
    %v312 = vadd.f32 %v310, %v311
    %v313 = vsel %vm303, %v292, 0.0
    %v314 = vadd.f32 %v312, %v313
    %v315 = vsel %vm303, %v293, 0.0
    %v316 = vadd.f32 %v314, %v315
    %v317 = vsel %vm303, %v294, 0.0
    %v318 = vadd.f32 %v316, %v317
    %v319 = vsel %vm303, %v295, 0.0
    %v320 = vadd.f32 %v318, %v319
    %v321 = vsel %vm303, %v296, 0.0
    %v322 = vadd.f32 %v320, %v321
    %v323 = vsel %vm303, %v297, 0.0
    %v324 = vadd.f32 %v322, %v323
    %v325 = vsel %vm303, %v298, 0.0
    %v326 = vadd.f32 %v324, %v325
    %v327 = vsel %vm303, %v299, 0.0
    %v328 = vadd.f32 %v326, %v327
    %v329 = vsel %vm303, %v300, 0.0
    %v330 = vadd.f32 %v328, %v329
    %v331 = vsel %vm303, %v301, 0.0
    %v332 = vadd.f32 %v330, %v331
    %v333 = vsel %vm303, %v302, 0.0
    %v334 = vadd.f32 %v332, %v333
    %v335 = vrot.slane %v334, 4
    %v336 = vadd.f32 %v334, %v335
    %v337 = vrot.slane %v336, 2
    %v338 = vadd.f32 %v336, %v337
    %v339 = vrot.slane %v338, 1
    %v340 = vadd.f32 %v338, %v339
    %vm341 = vcmask 57344
    %342 = vst.msk [vmem:[#allocation2] sm:$0x1] %vm341, %v340
    %v343 = vmul.f32 %v287, %v287
    %v344 = vmul.f32 %v288, %v288
    %v345 = vmul.f32 %v289, %v289
    %v346 = vmul.f32 %v290, %v290
    %v347 = vmul.f32 %v291, %v291
    %v348 = vmul.f32 %v292, %v292
    %v349 = vmul.f32 %v293, %v293
    %v350 = vmul.f32 %v294, %v294
    %v351 = vmul.f32 %v295, %v295
    %v352 = vmul.f32 %v296, %v296
    %v353 = vmul.f32 %v297, %v297
    %v354 = vmul.f32 %v298, %v298
    %v355 = vmul.f32 %v299, %v299
    %v356 = vmul.f32 %v300, %v300
    %v357 = vmul.f32 %v301, %v301
    %v358 = vmul.f32 %v302, %v302
    %v359 = vsel %vm303, %v343, 0.0
    %v360 = vsel %vm303, %v344, 0.0
    %v361 = vadd.f32 %v359, %v360
    %v362 = vsel %vm303, %v345, 0.0
    %v363 = vadd.f32 %v361, %v362
    %v364 = vsel %vm303, %v346, 0.0
    %v365 = vadd.f32 %v363, %v364
    %v366 = vsel %vm303, %v347, 0.0
    %v367 = vadd.f32 %v365, %v366
    %v368 = vsel %vm303, %v348, 0.0
    %v369 = vadd.f32 %v367, %v368
    %v370 = vsel %vm303, %v349, 0.0
    %v371 = vadd.f32 %v369, %v370
    %v372 = vsel %vm303, %v350, 0.0
    %v373 = vadd.f32 %v371, %v372
    %v374 = vsel %vm303, %v351, 0.0
    %v375 = vadd.f32 %v373, %v374
    %v376 = vsel %vm303, %v352, 0.0
    %v377 = vadd.f32 %v375, %v376
    %v378 = vsel %vm303, %v353, 0.0
    %v379 = vadd.f32 %v377, %v378
    %v380 = vsel %vm303, %v354, 0.0
    %v381 = vadd.f32 %v379, %v380
    %v382 = vsel %vm303, %v355, 0.0
    %v383 = vadd.f32 %v381, %v382
    %v384 = vsel %vm303, %v356, 0.0
    %v385 = vadd.f32 %v383, %v384
    %v386 = vsel %vm303, %v357, 0.0
    %v387 = vadd.f32 %v385, %v386
    %v388 = vsel %vm303, %v358, 0.0
    %v389 = vadd.f32 %v387, %v388
    %v390 = vrot.slane %v389, 4
    %v391 = vadd.f32 %v389, %v390
    %v392 = vrot.slane %v391, 2
    %v393 = vadd.f32 %v391, %v392
    %v394 = vrot.slane %v393, 1
    %v395 = vadd.f32 %v393, %v394
    %396 = vst.msk [vmem:[#allocation4] sm:$0x1] %vm341, %v395
    // Predicated region
    $region10: #{tpu_custom_call.1} parent=1 // pred_check
      _
    $region11: #{tpu_custom_call.1} parent=1 // pred_check_branch
      %398 = sbr.rel (0) target = $region13
    $region12: #{tpu_custom_call.1} parent=1 // pred_region
      _
    $region13: #{tpu_custom_call.1} parent=1 // pred_fallthru
      _
    // Predicated region
    $region14: #{tpu_custom_call.1} parent=1 // pred_check
      _
    $region15: #{tpu_custom_call.1} parent=1 // pred_check_branch
      %400 = sbr.rel (0) target = $region17
    $region16: #{tpu_custom_call.1} parent=1 // pred_region
      %402 = vsyncadd [#allocation3], 0
      %s404 = sshll.u32 [#allocation2], 4
      %s405 = int_to_ptr.vmem [resolvable:$true] %s404
      %s406 = sshll.u32 %s3, 4
      %s407 = int_to_ptr.hbm [resolvable:$true] %s406
      %409 = dma.vmem_to_hbm [thread:$0]  %s405, 16, %s407, [#allocation3]
    $region17: #{tpu_custom_call.1} parent=1 // pred_fallthru
      _
    // Predicated region
    $region18: #{tpu_custom_call.1} parent=1 // pred_check
      _
    $region19: #{tpu_custom_call.1} parent=1 // pred_check_branch
      %411 = sbr.rel (0) target = $region21
    $region20: #{tpu_custom_call.1} parent=1 // pred_region
      %413 = vsyncadd [#allocation5], 0
      %s415 = sshll.u32 [#allocation4], 4
      %s416 = int_to_ptr.vmem [resolvable:$true] %s415
      %s417 = sshll.u32 %s4, 4
      %s418 = int_to_ptr.hbm [resolvable:$true] %s417
      %420 = dma.vmem_to_hbm [thread:$0]  %s416, 16, %s418, [#allocation5]
    $region21: #{tpu_custom_call.1} parent=1 // pred_fallthru
      _
    // Predicated region
    $region22: #{tpu_custom_call.1} parent=1 // pred_check
      _
    $region23: #{tpu_custom_call.1} parent=1 // pred_check_branch
      %422 = sbr.rel (0) target = $region25
    $region24: #{tpu_custom_call.1} parent=1 // pred_region
      _
    $region25: #{tpu_custom_call.1} parent=1 // pred_fallthru
      _
    // Predicated region
    $region26: #{tpu_custom_call.1} parent=1 // pred_check
      _
    $region27: #{tpu_custom_call.1} parent=1 // pred_check_branch
      %424 = sbr.rel (0) target = $region29
    $region28: #{tpu_custom_call.1} parent=1 // pred_region
      %426 = dma.done [#allocation3], 16
    $region29: #{tpu_custom_call.1} parent=1 // pred_fallthru
      _
    // Predicated region
    $region30: #{tpu_custom_call.1} parent=1 // pred_check
      _
    $region31: #{tpu_custom_call.1} parent=1 // pred_check_branch
      %428 = sbr.rel (0) target = $region33
    $region32: #{tpu_custom_call.1} parent=1 // pred_region
      %430 = dma.done [#allocation5], 16
    $region33: #{tpu_custom_call.1} parent=1 // pred_fallthru
      _
    %431 = vsyncpa [#allocation3], 1
    %432 = vsyncpa [#allocation5], 1

</llo_original>
